<compile_context>
chip_gen: v7x
topology: tpu7x:2x2x1
jax: 0.10.0
libtpu: 0.0.40
codegen_flags: <defaults>
</compile_context>

<pallas_src>
import functools

import jax
import jax.numpy as jnp
from jax.experimental import pallas as pl
from jax.experimental.pallas import tpu as pltpu


def _residual_kernel(patches_ref, x_ref, w_ref, p_ref, o_ref, *,
                     res_scale, eps, use_actv):
    """Fused conv (single matmul) + BN (batch stats) + scaled residual + ReLU.

    patches_ref : (Cin*KH*KW, M)  im2col columns, M = N*H*W on the lane axis
    x_ref       : (C, M)          residual input, channel-major
    w_ref       : (Cout, Cin*KH*KW) conv weights
    p_ref       : (Cout, 2)       col 0 = gamma, col 1 = beta
    o_ref       : (Cout, M)       output, channel-major (lane-dense)
    """
    # --- convolution: one MXU matmul, f32 accumulation ---
    acc = jnp.dot(w_ref[...], patches_ref[...],
                  preferred_element_type=jnp.float32)          # (Cout, M)

    # --- BatchNorm2d training-mode stats, single pass (E[x], E[x^2]) ---
    mean = jnp.mean(acc, axis=1, keepdims=True)                # (Cout, 1)
    mean_sq = jnp.mean(acc * acc, axis=1, keepdims=True)       # (Cout, 1)
    var = jnp.maximum(mean_sq - mean * mean, 0.0)
    inv_std = jax.lax.rsqrt(var + eps)

    gamma = p_ref[:, 0:1]                                      # (Cout, 1)
    beta = p_ref[:, 1:2]

    # Collapsed per-channel affine (bias cancels under batch-stat BN):
    #   out = relu(acc * a + b + x)
    a = gamma * inv_std * res_scale                            # (Cout, 1)
    b = (beta - mean * gamma * inv_std) * res_scale            # (Cout, 1)

    y = acc * a + b + x_ref[...]                               # (Cout, M)
    if use_actv:
        y = jnp.maximum(y, 0.0)
    o_ref[...] = y.astype(o_ref.dtype)


def residual_forward(x_nchw, w_oihw, conv_bias, gamma, beta, *,
                     scale=0.1, req=True, use_actv=True, eps=1e-5):
    """Pallas equivalent of residual.forward (actv = ReLU)."""
    if not req:
        return x_nchw

    x = x_nchw.astype(jnp.float32)
    N, C, H, W = x.shape
    Cout, Cin, KH, KW = w_oihw.shape
    M = N * H * W
    K = Cin * KH * KW

    # --- wrapper-side layout plumbing (lane-dense slabs for the kernel) ---
    # im2col: rows ordered (ci, kh, kw) to match OIHW weight flattening,
    # columns ordered (n, h, w).
    xp = jnp.pad(x, ((0, 0), (0, 0), (1, 1), (1, 1)))           # pad=1
    taps = [xp[:, :, kh:kh + H, kw:kw + W]
            for kh in range(KH) for kw in range(KW)]            # each (N,C,H,W)
    patches = jnp.stack(taps, axis=2)                           # (N, C, KH*KW, H, W)
    patches = patches.transpose(1, 2, 0, 3, 4).reshape(K, M)    # (K, M)

    x_cm = x.transpose(1, 0, 2, 3).reshape(C, M)                # (C, M) residual
    w2d = w_oihw.reshape(Cout, K).astype(jnp.float32)           # (Cout, K)
    params = jnp.stack([gamma, beta], axis=1).astype(jnp.float32)  # (Cout, 2)

    # Conv bias cancels exactly under training-mode BatchNorm; not used.
    del conv_bias

    kernel = functools.partial(
        _residual_kernel,
        res_scale=float(scale),
        eps=float(eps),
        use_actv=use_actv,
    )

    flops = 2 * M * K * Cout + 10 * M * Cout
    bytes_accessed = 4 * (patches.size + x_cm.size + w2d.size +
                          params.size + Cout * M)

    out_cm = pl.pallas_call(
        kernel,
        out_shape=jax.ShapeDtypeStruct((Cout, M), jnp.float32),
        in_specs=[
            pl.BlockSpec(memory_space=pltpu.MemorySpace.VMEM),  # patches
            pl.BlockSpec(memory_space=pltpu.MemorySpace.VMEM),  # residual x
            pl.BlockSpec(memory_space=pltpu.MemorySpace.VMEM),  # weights
            pl.BlockSpec(memory_space=pltpu.MemorySpace.VMEM),  # gamma/beta
        ],
        out_specs=pl.BlockSpec(memory_space=pltpu.MemorySpace.VMEM),
        compiler_params=pltpu.CompilerParams(
            vmem_limit_bytes=32 * 1024 * 1024),
        cost_estimate=pl.CostEstimate(
            flops=flops, transcendentals=Cout,
            bytes_accessed=bytes_accessed),
    )(patches, x_cm, w2d, params)

    # (Cout, N*H*W) -> NCHW to match PyTorch output layout.
    return out_cm.reshape(Cout, N, H, W).transpose(1, 0, 2, 3)


def _reference_forward(x_nchw, w_oihw, conv_bias, gamma, beta, *,
                       scale=0.1, use_actv=True, eps=1e-5):
    """Plain-JAX reference for correctness checking."""
    conv = jax.lax.conv_general_dilated(
        x_nchw, w_oihw, window_strides=(1, 1), padding=((1, 1), (1, 1)),
        dimension_numbers=("NCHW", "OIHW", "NCHW"))
    conv = conv + conv_bias[None, :, None, None]
    mean = jnp.mean(conv, axis=(0, 2, 3), keepdims=True)
    var = jnp.mean((conv - mean) ** 2, axis=(0, 2, 3), keepdims=True)
    y = (conv - mean) * jax.lax.rsqrt(var + eps)
    y = y * gamma[None, :, None, None] + beta[None, :, None, None]
    out = y * scale + x_nchw
    if use_actv:
        out = jnp.maximum(out, 0.0)
    return out


if __name__ == "__main__":
    # Module config: residual(in_c=4, out_c=4, kernel_size=3, actv=ReLU)
    N, C, H, W = 2, 4, 16, 16
    KH = KW = 3

    key = jax.random.PRNGKey(0)
    kx, kw, kb = jax.random.split(key, 3)

    x = jax.random.normal(kx, (N, C, H, W), dtype=jnp.float32)

    # Deterministic parameter init (Conv2d weight/bias ~ uniform, BN gamma=1 beta=0).
    fan_in = C * KH * KW
    bound = 1.0 / (fan_in ** 0.5)
    w_oihw = jax.random.uniform(kw, (C, C, KH, KW), jnp.float32, -bound, bound)
    conv_bias = jax.random.uniform(kb, (C,), jnp.float32, -bound, bound)
    gamma = jnp.ones((C,), jnp.float32)
    beta = jnp.zeros((C,), jnp.float32)

    out = residual_forward(x, w_oihw, conv_bias, gamma, beta,
                           scale=0.1, req=True, use_actv=True)
    out = jax.block_until_ready(out)

    ref = _reference_forward(x, w_oihw, conv_bias, gamma, beta,
                             scale=0.1, use_actv=True)
    max_err = float(jnp.max(jnp.abs(out - ref)))
    assert out.shape == (N, C, H, W)
    assert max_err < 1e-3, f"mismatch vs reference: {max_err}"

    print("KERNEL_OK")
</pallas_src>

<mosaic_0001>
module attributes {stable_mosaic.version = 11 : i64} {
  func.func @_residual_kernel(%arg0: memref<36x512xf32, #tpu.memory_space<vmem>>, %arg1: memref<4x512xf32, #tpu.memory_space<vmem>>, %arg2: memref<4x36xf32, #tpu.memory_space<vmem>>, %arg3: memref<4x2xf32, #tpu.memory_space<vmem>>, %arg4: memref<4x512xf32, #tpu.memory_space<vmem>>) attributes {dimension_semantics = [], scalar_prefetch = 0 : i64, scratch_operands = 0 : i64, tpu.core_type = #tpu.core_type<tc>} {
    %c0 = arith.constant 0 : index
    %c0_0 = arith.constant 0 : index
    %0 = vector.load %arg2[%c0, %c0_0] : memref<4x36xf32, #tpu.memory_space<vmem>>, vector<4x36xf32>
    %c0_1 = arith.constant 0 : index
    %c0_2 = arith.constant 0 : index
    %1 = vector.load %arg0[%c0_1, %c0_2] : memref<36x512xf32, #tpu.memory_space<vmem>>, vector<36x512xf32>
    %cst = arith.constant dense<0.000000e+00> : vector<4x512xf32>
    %2 = tpu.matmul %0, %1, %cst {dimension_numbers = #tpu.dot_dimension_numbers<[1], [0], [0], [1], [0, 0, 1, 1], [], []>} : vector<4x36xf32>, vector<36x512xf32>, vector<4x512xf32> -> vector<4x512xf32>
    %cst_3 = arith.constant dense<0.000000e+00> : vector<4xf32>
    %3 = vector.multi_reduction <add>, %2, %cst_3 [1] : vector<4x512xf32> to vector<4xf32>
    %4 = vector.shape_cast %3 : vector<4xf32> to vector<4x1xf32>
    %cst_4 = arith.constant 5.120000e+02 : f32
    %5 = vector.broadcast %cst_4 : f32 to vector<4x1xf32>
    %6 = arith.divf %4, %5 : vector<4x1xf32>
    %7 = arith.mulf %2, %2 : vector<4x512xf32>
    %cst_5 = arith.constant dense<0.000000e+00> : vector<4xf32>
    %8 = vector.multi_reduction <add>, %7, %cst_5 [1] : vector<4x512xf32> to vector<4xf32>
    %9 = vector.shape_cast %8 : vector<4xf32> to vector<4x1xf32>
    %cst_6 = arith.constant 5.120000e+02 : f32
    %10 = vector.broadcast %cst_6 : f32 to vector<4x1xf32>
    %11 = arith.divf %9, %10 : vector<4x1xf32>
    %12 = arith.mulf %6, %6 : vector<4x1xf32>
    %13 = arith.subf %11, %12 : vector<4x1xf32>
    %cst_7 = arith.constant 0.000000e+00 : f32
    %14 = vector.broadcast %cst_7 : f32 to vector<4x1xf32>
    %15 = arith.maximumf %13, %14 : vector<4x1xf32>
    %cst_8 = arith.constant 9.99999974E-6 : f32
    %16 = vector.broadcast %cst_8 : f32 to vector<4x1xf32>
    %17 = arith.addf %15, %16 : vector<4x1xf32>
    %18 = math.rsqrt %17 : vector<4x1xf32>
    %c0_9 = arith.constant 0 : index
    %c0_10 = arith.constant 0 : index
    %19 = vector.load %arg3[%c0_9, %c0_10] : memref<4x2xf32, #tpu.memory_space<vmem>>, vector<4x1xf32>
    %c0_11 = arith.constant 0 : index
    %c1 = arith.constant 1 : index
    %20 = vector.load %arg3[%c0_11, %c1] : memref<4x2xf32, #tpu.memory_space<vmem>>, vector<4x1xf32>
    %21 = arith.mulf %19, %18 : vector<4x1xf32>
    %cst_12 = arith.constant 1.000000e-01 : f32
    %22 = vector.broadcast %cst_12 : f32 to vector<4x1xf32>
    %23 = arith.mulf %21, %22 : vector<4x1xf32>
    %24 = arith.mulf %6, %19 : vector<4x1xf32>
    %25 = arith.mulf %24, %18 : vector<4x1xf32>
    %26 = arith.subf %20, %25 : vector<4x1xf32>
    %cst_13 = arith.constant 1.000000e-01 : f32
    %27 = vector.broadcast %cst_13 : f32 to vector<4x1xf32>
    %28 = arith.mulf %26, %27 : vector<4x1xf32>
    %29 = vector.broadcast %23 : vector<4x1xf32> to vector<4x512xf32>
    %30 = arith.mulf %2, %29 : vector<4x512xf32>
    %31 = vector.broadcast %28 : vector<4x1xf32> to vector<4x512xf32>
    %32 = arith.addf %30, %31 : vector<4x512xf32>
    %c0_14 = arith.constant 0 : index
    %c0_15 = arith.constant 0 : index
    %33 = vector.load %arg1[%c0_14, %c0_15] : memref<4x512xf32, #tpu.memory_space<vmem>>, vector<4x512xf32>
    %34 = arith.addf %32, %33 : vector<4x512xf32>
    %cst_16 = arith.constant 0.000000e+00 : f32
    %35 = vector.broadcast %cst_16 : f32 to vector<4x512xf32>
    %36 = arith.maximumf %34, %35 : vector<4x512xf32>
    %c0_17 = arith.constant 0 : index
    %c0_18 = arith.constant 0 : index
    %37 = vector.load %arg4[%c0_17, %c0_18] : memref<4x512xf32, #tpu.memory_space<vmem>>, vector<4x512xf32>
    tpu.vector_store %arg4[%c0_17, %c0_18], %36 {strides = array<i32>} : memref<4x512xf32, #tpu.memory_space<vmem>>, vector<4x512xf32>,
    return
  }
}

</mosaic_0001>

<llo_original>
// kernel: tpu_custom_call.1
$region0: #{tpu_custom_call.1}
  #allocation0 [shape = 'u32[]', space=smem, size = 0x4, offset = 0x4, fixed_abs, tag = 'smem constant byte address 0x4 - core index']
  #allocation1 [shape = 'u32[144,128]{1,0:T(1,128)}', space=vmem, size = 0x12000, scoped, tag = 'internal scratch']
  %s0 = inlined_call_operand.hbm [shape: f32[36,512], index: 0, kind: input, shape index: {}]
  %s1 = inlined_call_operand.hbm [shape: f32[4,512], index: 1, kind: input, shape index: {}]
  %s2 = inlined_call_operand.vmem [shape: f32[4,36], index: 2, kind: input, shape index: {}]
  %s3 = inlined_call_operand.vmem [shape: f32[4,2], index: 3, kind: input, shape index: {}]
  %s4 = inlined_call_operand.hbm [shape: f32[4,512], index: 4, kind: output, shape index: {}]
  %s5 = sld [smem:[#allocation0]]
  $region34: #{tpu_custom_call.1} parent=0
    _
  %s7 = ssub.s32 1, %s5
  %s8 = scalar_select 0, %s7, %s5
  $region1: #{tpu_custom_call.1} parent=0
    #allocation2 [shape = 'u8[81920]{0}', space=vmem, size = 0x14000, scoped, tag = 'input window, operand 0, single buffered']
    #allocation3 [shape = 's32[1]{0}', space=sflag, size = 0x4, scoped, tag = 'scoped memory for tpu_custom_call.1']
    #allocation4 [shape = 's32[1]{0}', space=sflag, size = 0x4, scoped, tag = 'scoped memory for tpu_custom_call.1']
    #allocation5 [shape = 'u8[8192]{0}', space=vmem, size = 0x2000, scoped, tag = 'input window, operand 1, single buffered']
    #allocation6 [shape = 's32[1]{0}', space=sflag, size = 0x4, scoped, tag = 'scoped memory for tpu_custom_call.1']
    #allocation7 [shape = 'u8[8192]{0}', space=vmem, size = 0x2000, scoped, tag = 'output window, operand 0, single buffered']
    %9 = vsyncpa [#allocation3], 0
    %10 = vsyncpa [#allocation6], 0
    %11 = vsyncpa [#allocation4], 0
    // Predicated region
    $region2: #{tpu_custom_call.1} parent=1 // pred_check
      _
    $region3: #{tpu_custom_call.1} parent=1 // pred_check_branch
      %13 = sbr.rel (0) target = $region5
    $region4: #{tpu_custom_call.1} parent=1 // pred_region
      %s15 = ssub.s32 2560, 2560
      %16 = vsyncadd [#allocation3], %s15
      %s17 = sshll.u32 [#allocation2], 4
      %s18 = int_to_ptr.vmem [resolvable:$true] %s17
      %23 = dma.hbm_to_vmem [thread:$0]  %s0, 2560, %s18, [#allocation3], 512, 512, 32
    $region5: #{tpu_custom_call.1} parent=1 // pred_fallthru
      _
    // Predicated region
    $region6: #{tpu_custom_call.1} parent=1 // pred_check
      _
    $region7: #{tpu_custom_call.1} parent=1 // pred_check_branch
      %25 = sbr.rel (0) target = $region9
    $region8: #{tpu_custom_call.1} parent=1 // pred_region
      %s27 = ssub.s32 256, 256
      %28 = vsyncadd [#allocation6], %s27
      %s30 = sshll.u32 [#allocation5], 4
      %s31 = int_to_ptr.vmem [resolvable:$true] %s30
      %33 = dma.hbm_to_vmem [thread:$0]  %s1, 256, %s31, [#allocation6]
    $region9: #{tpu_custom_call.1} parent=1 // pred_fallthru
      _
    // Predicated region
    $region10: #{tpu_custom_call.1} parent=1 // pred_check
      _
    $region11: #{tpu_custom_call.1} parent=1 // pred_check_branch
      %35 = sbr.rel (0) target = $region13
    $region12: #{tpu_custom_call.1} parent=1 // pred_region
      _
    $region13: #{tpu_custom_call.1} parent=1 // pred_fallthru
      _
    // Predicated region
    $region14: #{tpu_custom_call.1} parent=1 // pred_check
      _
    $region15: #{tpu_custom_call.1} parent=1 // pred_check_branch
      %37 = sbr.rel (0) target = $region17
    $region16: #{tpu_custom_call.1} parent=1 // pred_region
      _
    $region17: #{tpu_custom_call.1} parent=1 // pred_fallthru
      _
    // Predicated region
    $region18: #{tpu_custom_call.1} parent=1 // pred_check
      _
    $region19: #{tpu_custom_call.1} parent=1 // pred_check_branch
      %39 = sbr.rel (0) target = $region21
    $region20: #{tpu_custom_call.1} parent=1 // pred_region
      %40 = dma.done [#allocation3], 2560
    $region21: #{tpu_custom_call.1} parent=1 // pred_fallthru
      _
    // Predicated region
    $region22: #{tpu_custom_call.1} parent=1 // pred_check
      _
    $region23: #{tpu_custom_call.1} parent=1 // pred_check_branch
      %42 = sbr.rel (0) target = $region25
    $region24: #{tpu_custom_call.1} parent=1 // pred_region
      %43 = dma.done [#allocation6], 256
    $region25: #{tpu_custom_call.1} parent=1 // pred_fallthru
      _
    %v44 = vld [vmem:[%s2] sm:$0xf]
    %v45 = vld [vmem:[#allocation2] sm:$0xff]
    %v46 = vld [vmem:[#allocation2 + $0x8] sm:$0xff]
    %v47 = vld [vmem:[#allocation2 + $0x10] sm:$0xff]
    %v48 = vld [vmem:[#allocation2 + $0x18] sm:$0xff]
    %v49 = vld [vmem:[#allocation2 + $0x20] sm:$0xff]
    %v50 = vld [vmem:[#allocation2 + $0x28] sm:$0xff]
    %v51 = vld [vmem:[#allocation2 + $0x30] sm:$0xff]
    %v52 = vld [vmem:[#allocation2 + $0x38] sm:$0xff]
    %v53 = vld [vmem:[#allocation2 + $0x40] sm:$0xff]
    %v54 = vld [vmem:[#allocation2 + $0x48] sm:$0xff]
    %v55 = vld [vmem:[#allocation2 + $0x50] sm:$0xff]
    %v56 = vld [vmem:[#allocation2 + $0x58] sm:$0xff]
    %v57 = vld [vmem:[#allocation2 + $0x60] sm:$0xff]
    %v58 = vld [vmem:[#allocation2 + $0x68] sm:$0xff]
    %v59 = vld [vmem:[#allocation2 + $0x70] sm:$0xff]
    %v60 = vld [vmem:[#allocation2 + $0x78] sm:$0xff]
    %v61 = vld [vmem:[#allocation2 + $0x80] sm:$0xf]
    %v62 = vld [vmem:[#allocation2 + $0x88] sm:$0xf]
    %v63 = vld [vmem:[#allocation2 + $0x90] sm:$0xf]
    %v64 = vld [vmem:[#allocation2 + $0x98] sm:$0xf]
    %vm65 = vcmask 293888
    %v67 = vsel %vm65, %v44, 0
    %vm69 = vcmask 1043456
    %v71 = vsel %vm69, %v61, 0
    %v74 = vsel %vm69, %v62, 0
    %v77 = vsel %vm69, %v63, 0
    %v80 = vsel %vm69, %v64, 0
    %82 = vmatprep.subr.mxu0 %v46
    %83 = vmatpush1.msra.mxu0 %v45
    %84 = vmatprep.subr.mxu0 %v50
    %85 = vmatpush1.msra.mxu0 %v49
    %86 = vmatprep.subr.mxu0 %v54
    %87 = vmatpush1.msra.mxu0 %v53
    %88 = vmatprep.subr.mxu0 %v58
    %89 = vmatpush1.msra.mxu0 %v57
    %90 = vmatprep.subr.mxu0 %v74
    %91 = vmatpush1.msra.mxu0 %v71
    %92 = vmatprep.subr.mxu0 0.0
    %93 = vmatpush1.msra.mxu0 0.0
    %94 = vmatprep.subr.mxu0 0.0
    %95 = vmatpush1.msra.mxu0 0.0
    %96 = vmatprep.subr.mxu0 0.0
    %97 = vmatpush1.msra.mxu0 0.0
    %98 = vmatprep.subr.mxu0 0.0
    %99 = vmatpush1.msra.mxu0 0.0
    %100 = vmatprep.subr.mxu0 0.0
    %101 = vmatpush1.msra.mxu0 0.0
    %102 = vmatprep.subr.mxu0 0.0
    %103 = vmatpush1.msra.mxu0 0.0
    %104 = vmatprep.subr.mxu0 0.0
    %105 = vmatpush1.msra.mxu0 0.0
    %106 = vmatprep.subr.mxu0 0.0
    %107 = vmatpush1.msra.mxu0 0.0
    %108 = vmatprep.subr.mxu0 0.0
    %109 = vmatpush1.msra.mxu0 0.0
    %110 = vmatprep.subr.mxu0 0.0
    %111 = vmatpush1.msra.mxu0 0.0
    %112 = vmatprep.subr.mxu0 0.0
    %113 = vmatpush1.msra.mxu0 0.0
    %114 = vmatprep.subr.mxu0 0.0
    %115 = vmatpush1.msra.mxu0 0.0
    %116 = vmatprep.subr.mxu0 0.0
    %117 = vmatpush1.msra.mxu0 0.0
    %118 = vmatprep.subr.mxu0 0.0
    %119 = vmatpush1.msra.mxu0 0.0
    %120 = vmatprep.subr.mxu0 0.0
    %121 = vmatpush1.msra.mxu0 0.0
    %122 = vmatprep.subr.mxu0 0.0
    %123 = vmatpush1.msra.mxu0 0.0
    %124 = vmatprep.subr.mxu0 0.0
    %125 = vmatpush1.msra.mxu0 0.0
    %126 = vmatprep.subr.mxu0 0.0
    %127 = vmatpush1.msra.mxu0 0.0
    %128 = vmatprep.subr.mxu0 0.0
    %129 = vmatpush1.msra.mxu0 0.0
    %130 = vmatprep.subr.mxu0 0.0
    %131 = vmatpush1.msra.mxu0 0.0
    %132 = vmatprep.subr.mxu0 0.0
    %133 = vmatpush1.msra.mxu0 0.0
    %134 = vmatprep.subr.mxu0 0.0
    %135 = vmatpush1.msra.mxu0 0.0
    %136 = vmatprep.subr.mxu0 0.0
    %137 = vmatpush1.msra.mxu0 0.0
    %138 = vmatprep.subr.mxu0 0.0
    %139 = vmatpush1.msra.mxu0 0.0
    %140 = vmatprep.subr.mxu0 0.0
    %141 = vmatpush1.msra.mxu0 0.0
    %142 = vmatprep.subr.mxu0 0.0
    %143 = vmatpush1.msra.mxu0 0.0
    %144 = vmatprep.subr.mxu0 0.0
    %145 = vmatpush1.msra.mxu0 0.0
    %146 = vmatprep.mubr.f32.mxu0 0.0
    %147 = vmatmul.mubr.f32.gmra.mrb[0].mxu0 %v67
    %v148 = vpop.f32.mrb[0].mxu0
    %v149 = vadd.f32 0.0, %v148
    %v150 = vpop.f32.mrb[0].mxu0
    %v151 = vadd.f32 0.0, %v150
    %152 = vdwg.mxu0
    %153 = vmatprep.subr.mxu0 %v48
    %154 = vmatpush1.msra.mxu0 %v47
    %155 = vmatprep.subr.mxu0 %v52
    %156 = vmatpush1.msra.mxu0 %v51
    %157 = vmatprep.subr.mxu0 %v56
    %158 = vmatpush1.msra.mxu0 %v55
    %159 = vmatprep.subr.mxu0 %v60
    %160 = vmatpush1.msra.mxu0 %v59
    %161 = vmatprep.subr.mxu0 %v80
    %162 = vmatpush1.msra.mxu0 %v77
    %163 = vmatprep.subr.mxu0 0.0
    %164 = vmatpush1.msra.mxu0 0.0
    %165 = vmatprep.subr.mxu0 0.0
    %166 = vmatpush1.msra.mxu0 0.0
    %167 = vmatprep.subr.mxu0 0.0
    %168 = vmatpush1.msra.mxu0 0.0
    %169 = vmatprep.subr.mxu0 0.0
    %170 = vmatpush1.msra.mxu0 0.0
    %171 = vmatprep.subr.mxu0 0.0
    %172 = vmatpush1.msra.mxu0 0.0
    %173 = vmatprep.subr.mxu0 0.0
    %174 = vmatpush1.msra.mxu0 0.0
    %175 = vmatprep.subr.mxu0 0.0
    %176 = vmatpush1.msra.mxu0 0.0
    %177 = vmatprep.subr.mxu0 0.0
    %178 = vmatpush1.msra.mxu0 0.0
    %179 = vmatprep.subr.mxu0 0.0
    %180 = vmatpush1.msra.mxu0 0.0
    %181 = vmatprep.subr.mxu0 0.0
    %182 = vmatpush1.msra.mxu0 0.0
    %183 = vmatprep.subr.mxu0 0.0
    %184 = vmatpush1.msra.mxu0 0.0
    %185 = vmatprep.subr.mxu0 0.0
    %186 = vmatpush1.msra.mxu0 0.0
    %187 = vmatprep.subr.mxu0 0.0
    %188 = vmatpush1.msra.mxu0 0.0
    %189 = vmatprep.subr.mxu0 0.0
    %190 = vmatpush1.msra.mxu0 0.0
    %191 = vmatprep.subr.mxu0 0.0
    %192 = vmatpush1.msra.mxu0 0.0
    %193 = vmatprep.subr.mxu0 0.0
    %194 = vmatpush1.msra.mxu0 0.0
    %195 = vmatprep.subr.mxu0 0.0
    %196 = vmatpush1.msra.mxu0 0.0
    %197 = vmatprep.subr.mxu0 0.0
    %198 = vmatpush1.msra.mxu0 0.0
    %199 = vmatprep.subr.mxu0 0.0
    %200 = vmatpush1.msra.mxu0 0.0
    %201 = vmatprep.subr.mxu0 0.0
    %202 = vmatpush1.msra.mxu0 0.0
    %203 = vmatprep.subr.mxu0 0.0
    %204 = vmatpush1.msra.mxu0 0.0
    %205 = vmatprep.subr.mxu0 0.0
    %206 = vmatpush1.msra.mxu0 0.0
    %207 = vmatprep.subr.mxu0 0.0
    %208 = vmatpush1.msra.mxu0 0.0
    %209 = vmatprep.subr.mxu0 0.0
    %210 = vmatpush1.msra.mxu0 0.0
    %211 = vmatprep.subr.mxu0 0.0
    %212 = vmatpush1.msra.mxu0 0.0
    %213 = vmatprep.subr.mxu0 0.0
    %214 = vmatpush1.msra.mxu0 0.0
    %215 = vmatprep.subr.mxu0 0.0
    %216 = vmatpush1.msra.mxu0 0.0
    %217 = vmatprep.mubr.f32.mxu0 0.0
    %218 = vmatmul.mubr.f32.gmra.mrb[0].mxu0 %v67
    %v219 = vpop.f32.mrb[0].mxu0
    %v220 = vadd.f32 0.0, %v219
    %v221 = vpop.f32.mrb[0].mxu0
    %v222 = vadd.f32 0.0, %v221
    %223 = vdwg.mxu0
    %v224 = vsel %vm69, %v149, 0.0
    %v225 = vsel %vm69, %v151, 0.0
    %v226 = vadd.f32 %v224, %v225
    %v227 = vsel %vm69, %v220, 0.0
    %v228 = vadd.f32 %v226, %v227
    %v229 = vsel %vm69, %v222, 0.0
    %v230 = vadd.f32 %v228, %v229
    %231 = vadd.xlane.f32.xlu0 %v230
    %v232 = vpop.xlane.xlu0 %231
    %v233 = vrcp.pop 512.0
    %v234 = vmul.f32 %v232, %v233
    %v235 = vmul.f32 %v149, %v149
    %v236 = vmul.f32 %v151, %v151
    %v237 = vmul.f32 %v220, %v220
    %v238 = vmul.f32 %v222, %v222
    %v239 = vsel %vm69, %v235, 0.0
    %v240 = vsel %vm69, %v236, 0.0
    %v241 = vadd.f32 %v239, %v240
    %v242 = vsel %vm69, %v237, 0.0
    %v243 = vadd.f32 %v241, %v242
    %v244 = vsel %vm69, %v238, 0.0
    %v245 = vadd.f32 %v243, %v244
    %246 = vadd.xlane.f32.xlu0 %v245
    %v247 = vpop.xlane.xlu0 %246
    %v248 = vmul.f32 %v247, %v233
    %v249 = vmul.f32 %v234, %v234
    %v250 = vsub.f32 %v248, %v249
    %v251 = vmax.f32 %v250, 0.0
    %v252 = vadd.f32 %v251, 1e-05
    %v253 = vrsqrt.pop %v252
    %v254 = vld [vmem:[%s3] sm:$0xf]
    %v255 = vmul.f32 %v254, %v253
    %v256 = vmul.f32 %v255, 0.1
    %v257 = vmul.f32 %v234, %v254
    %v258 = vmul.f32 %v257, %v253
    %260 = vrot.lane.b32.xlu0 %v258, 1
    %v261 = vpop.permute.xlu0 %260
    %v263 = vsub.f32 %v254, %v261
    %v264 = vmul.f32 %v263, 0.1
    %266 = vset.pattern.permute.xlu0 0
    %267 = vperm.xlu0 %266, %v256
    %v268 = vpop.permute.xlu0 %267
    %v270 = vmul.f32 %v149, %v268
    %v271 = vmul.f32 %v151, %v268
    %v272 = vmul.f32 %v220, %v268
    %v273 = vmul.f32 %v222, %v268
    %275 = vset.pattern.permute.xlu0 1
    %276 = vperm.xlu0 %275, %v264
    %v277 = vpop.permute.xlu0 %276
    %v279 = vadd.f32 %v270, %v277
    %v280 = vadd.f32 %v271, %v277
    %v281 = vadd.f32 %v272, %v277
    %v282 = vadd.f32 %v273, %v277
    %v283 = vld [vmem:[#allocation5] sm:$0xff]
    %v284 = vld [vmem:[#allocation5 + $0x8] sm:$0xff]
    %v287 = vcombine.high %v283, %v283
    %v288 = vcombine.high %v284, %v284
    %v291 = vadd.f32 %v279, %v283
    %v292 = vadd.f32 %v280, %v287
    %v293 = vadd.f32 %v281, %v284
    %v294 = vadd.f32 %v282, %v288
    %v295 = vmax.f32 %v291, 0.0
    %v296 = vmax.f32 %v292, 0.0
    %v297 = vmax.f32 %v293, 0.0
    %v298 = vmax.f32 %v294, 0.0
    %v303 = vcombine.low %v295, %v296
    %v304 = vcombine.low %v297, %v298
    %307 = vst [vmem:[#allocation7] sm:$0xff] %v303
    %308 = vst [vmem:[#allocation7 + $0x8] sm:$0xff] %v304
    // Predicated region
    $region26: #{tpu_custom_call.1} parent=1 // pred_check
      _
    $region27: #{tpu_custom_call.1} parent=1 // pred_check_branch
      %310 = sbr.rel (0) target = $region29
    $region28: #{tpu_custom_call.1} parent=1 // pred_region
      %s312 = ssub.s32 256, 256
      %313 = vsyncadd [#allocation4], %s312
      %s315 = sshll.u32 [#allocation7], 4
      %s316 = int_to_ptr.vmem [resolvable:$true] %s315
      %318 = dma.vmem_to_hbm [thread:$0]  %s316, 256, %s4, [#allocation4]
    $region29: #{tpu_custom_call.1} parent=1 // pred_fallthru
      _
    // Predicated region
    $region30: #{tpu_custom_call.1} parent=1 // pred_check
      _
    $region31: #{tpu_custom_call.1} parent=1 // pred_check_branch
      %320 = sbr.rel (0) target = $region33
    $region32: #{tpu_custom_call.1} parent=1 // pred_region
      %321 = dma.done [#allocation4], 256
    $region33: #{tpu_custom_call.1} parent=1 // pred_fallthru
      _
    %322 = vsyncpa [#allocation3], 1
    %323 = vsyncpa [#allocation6], 1
    %324 = vsyncpa [#allocation4], 1

</llo_original>
